<compile_context>
chip_gen: v7x
topology: tpu7x:2x2x1
jax: 0.10.0
libtpu: 0.0.40
codegen_flags: <defaults>
</compile_context>

<pallas_src>
import functools

import jax
import jax.numpy as jnp
from jax.experimental import pallas as pl
from jax.experimental.pallas import tpu as pltpu


# ----------------------- config (small, Qwen2-like) -------------------------
BATCH = 2
SEQ = 16
HIDDEN = 128
INTERMEDIATE = 256


# ------------------------------- kernel -------------------------------------
def qwen2_mlp_kernel(x_ref, wg_ref, wu_ref, wd_ref, o_ref, acc_ref):
    """Grid = (M_tiles, I_tiles).

    x_ref : (tm, H)    token tile (batch*seq flattened)
    wg_ref: (H, ti)    gate_proj weight slice
    wu_ref: (H, ti)    up_proj weight slice
    wd_ref: (ti, H)    down_proj weight slice
    o_ref : (tm, H)    output tile (resident across the I axis)
    acc_ref: VMEM (tm, H) f32 accumulator over the intermediate axis
    """
    i = pl.program_id(1)

    @pl.when(i == 0)
    def _():
        acc_ref[...] = jnp.zeros_like(acc_ref)

    x = x_ref[...]

    # gate / up projections for this intermediate slice (MXU, f32 accumulate)
    g = jnp.dot(x, wg_ref[...], preferred_element_type=jnp.float32)   # (tm, ti)
    u = jnp.dot(x, wu_ref[...], preferred_element_type=jnp.float32)   # (tm, ti)

    # SiLU(g) * u  — exp goes to the EUP slot, multiplies to the VPU.
    sig = 1.0 / (1.0 + jnp.exp(-g))
    inter = (g * sig) * u                                              # (tm, ti)

    # partial down_proj contribution for this intermediate slice
    acc_ref[...] += jnp.dot(inter, wd_ref[...],
                            preferred_element_type=jnp.float32)        # (tm, H)

    @pl.when(i == pl.num_programs(1) - 1)
    def _():
        o_ref[...] = acc_ref[...].astype(o_ref.dtype)


# ------------------------------- wrapper -------------------------------------
@functools.partial(jax.jit, static_argnames=("tm", "ti"))
def qwen2_mlp(x, wg, wu, wd, *, tm=None, ti=None):
    """x: (B, S, H); wg/wu: (H, I); wd: (I, H). Returns (B, S, H)."""
    B, S, H = x.shape
    I = wg.shape[1]
    M = B * S

    if tm is None:
        tm = M if M <= 256 else 256          # token tile (rows)
    if ti is None:
        ti = I if I <= 512 else 512          # intermediate tile (reduction)
    assert M % tm == 0 and I % ti == 0
    assert tm % 8 == 0 and H % 128 == 0 and ti % 128 == 0, "lane/sublane alignment"

    x2d = x.reshape(M, H)
    grid = (M // tm, I // ti)

    out = pl.pallas_call(
        qwen2_mlp_kernel,
        out_shape=jax.ShapeDtypeStruct((M, H), x.dtype),
        grid_spec=pltpu.PrefetchScalarGridSpec(
            num_scalar_prefetch=0,
            grid=grid,
            in_specs=[
                pl.BlockSpec((tm, H), lambda m, i: (m, 0)),    # x tile
                pl.BlockSpec((H, ti), lambda m, i: (0, i)),    # gate_proj slice
                pl.BlockSpec((H, ti), lambda m, i: (0, i)),    # up_proj slice
                pl.BlockSpec((ti, H), lambda m, i: (i, 0)),    # down_proj slice
            ],
            out_specs=pl.BlockSpec((tm, H), lambda m, i: (m, 0)),
            scratch_shapes=[pltpu.VMEM((tm, H), jnp.float32)],
        ),
        compiler_params=pltpu.CompilerParams(
            # token axis is independent (megacore-shardable on v7x);
            # intermediate axis is a sequential reduction — must be arbitrary.
            dimension_semantics=("parallel", "arbitrary")),
    )(x2d, wg, wu, wd)

    return out.reshape(B, S, H)


# ------------------------------ reference ------------------------------------
def reference(x, wg, wu, wd):
    hp = jax.lax.Precision.HIGHEST
    g = jnp.dot(x, wg, precision=hp)
    u = jnp.dot(x, wu, precision=hp)
    inter = jax.nn.silu(g) * u
    return jnp.dot(inter, wd, precision=hp)


# --------------------------------- main ---------------------------------------
if __name__ == "__main__":
    key = jax.random.PRNGKey(0)
    ks = jax.random.split(key, 4)
    scale = 0.02

    x = jax.random.normal(ks[0], (BATCH, SEQ, HIDDEN), jnp.float32)

    # parameters stored as (in, out) so y = x @ W (no bias in Qwen2MLP)
    wg = scale * jax.random.normal(ks[1], (HIDDEN, INTERMEDIATE), jnp.float32)
    wu = scale * jax.random.normal(ks[2], (HIDDEN, INTERMEDIATE), jnp.float32)
    wd = scale * jax.random.normal(ks[3], (INTERMEDIATE, HIDDEN), jnp.float32)

    out = qwen2_mlp(x, wg, wu, wd)
    out = jax.block_until_ready(out)

    ref = reference(x, wg, wu, wd)
    assert out.shape == (BATCH, SEQ, HIDDEN)
    max_err = jnp.max(jnp.abs(out - ref))
    assert jnp.allclose(out, ref, atol=1e-4, rtol=1e-3), f"max abs err {max_err}"

    print("KERNEL_OK")
</pallas_src>

<mosaic_0001>
module attributes {stable_mosaic.version = 11 : i64} {
  func.func @qwen2_mlp_kernel(%arg0: i32, %arg1: i32, %arg2: memref<32x128xf32, #tpu.memory_space<vmem>>, %arg3: memref<128x256xf32, #tpu.memory_space<vmem>>, %arg4: memref<128x256xf32, #tpu.memory_space<vmem>>, %arg5: memref<256x128xf32, #tpu.memory_space<vmem>>, %arg6: memref<32x128xf32, #tpu.memory_space<vmem>>, %arg7: memref<32x128xf32, #tpu.memory_space<vmem>>) attributes {dimension_semantics = [#tpu.dimension_semantics<parallel>, #tpu.dimension_semantics<arbitrary>], iteration_bounds = array<i64: 1, 1>, scalar_prefetch = 0 : i64, scratch_operands = 1 : i64, tpu.core_type = #tpu.core_type<tc>, window_params = [{transform_indices = @transform_0, window_bounds = array<i64: 32, 128>}, {transform_indices = @transform_1, window_bounds = array<i64: 128, 256>}, {transform_indices = @transform_2, window_bounds = array<i64: 128, 256>}, {transform_indices = @transform_3, window_bounds = array<i64: 256, 128>}, {transform_indices = @transform_4, window_bounds = array<i64: 32, 128>}]} {
    %c0_i32 = arith.constant 0 : i32
    %0 = arith.cmpi eq, %arg1, %c0_i32 : i32
    %1 = arith.extui %0 : i1 to i32
    %c0_i32_0 = arith.constant 0 : i32
    %2 = arith.cmpi ne, %1, %c0_i32_0 : i32
    scf.if %2 {
      %cst_19 = arith.constant 0.000000e+00 : f32
      %25 = vector.broadcast %cst_19 : f32 to vector<32x128xf32>
      %c0_20 = arith.constant 0 : index
      %c0_21 = arith.constant 0 : index
      %26 = vector.load %arg7[%c0_20, %c0_21] : memref<32x128xf32, #tpu.memory_space<vmem>>, vector<32x128xf32>
      tpu.vector_store %arg7[%c0_20, %c0_21], %25 {strides = array<i32>} : memref<32x128xf32, #tpu.memory_space<vmem>>, vector<32x128xf32>,
    } else {
    }
    %c0 = arith.constant 0 : index
    %c0_1 = arith.constant 0 : index
    %3 = vector.load %arg2[%c0, %c0_1] : memref<32x128xf32, #tpu.memory_space<vmem>>, vector<32x128xf32>
    %c0_2 = arith.constant 0 : index
    %c0_3 = arith.constant 0 : index
    %4 = vector.load %arg3[%c0_2, %c0_3] : memref<128x256xf32, #tpu.memory_space<vmem>>, vector<128x256xf32>
    %cst = arith.constant dense<0.000000e+00> : vector<32x256xf32>
    %5 = tpu.matmul %3, %4, %cst {dimension_numbers = #tpu.dot_dimension_numbers<[1], [0], [0], [1], [0, 0, 1, 1], [], []>} : vector<32x128xf32>, vector<128x256xf32>, vector<32x256xf32> -> vector<32x256xf32>
    %c0_4 = arith.constant 0 : index
    %c0_5 = arith.constant 0 : index
    %6 = vector.load %arg4[%c0_4, %c0_5] : memref<128x256xf32, #tpu.memory_space<vmem>>, vector<128x256xf32>
    %cst_6 = arith.constant dense<0.000000e+00> : vector<32x256xf32>
    %7 = tpu.matmul %3, %6, %cst_6 {dimension_numbers = #tpu.dot_dimension_numbers<[1], [0], [0], [1], [0, 0, 1, 1], [], []>} : vector<32x128xf32>, vector<128x256xf32>, vector<32x256xf32> -> vector<32x256xf32>
    %cst_7 = arith.constant 0.000000e+00 : f32
    %8 = vector.broadcast %cst_7 : f32 to vector<32x256xf32>
    %9 = arith.subf %8, %5 : vector<32x256xf32>
    %10 = math.exp %9 : vector<32x256xf32>
    %cst_8 = arith.constant 1.000000e+00 : f32
    %11 = vector.broadcast %cst_8 : f32 to vector<32x256xf32>
    %12 = arith.addf %11, %10 : vector<32x256xf32>
    %cst_9 = arith.constant 1.000000e+00 : f32
    %13 = vector.broadcast %cst_9 : f32 to vector<32x256xf32>
    %14 = arith.divf %13, %12 : vector<32x256xf32>
    %15 = arith.mulf %5, %14 : vector<32x256xf32>
    %16 = arith.mulf %15, %7 : vector<32x256xf32>
    %c0_10 = arith.constant 0 : index
    %c0_11 = arith.constant 0 : index
    %17 = vector.load %arg7[%c0_10, %c0_11] : memref<32x128xf32, #tpu.memory_space<vmem>>, vector<32x128xf32>
    %c0_12 = arith.constant 0 : index
    %c0_13 = arith.constant 0 : index
    %18 = vector.load %arg5[%c0_12, %c0_13] : memref<256x128xf32, #tpu.memory_space<vmem>>, vector<256x128xf32>
    %cst_14 = arith.constant dense<0.000000e+00> : vector<32x128xf32>
    %19 = tpu.matmul %16, %18, %cst_14 {dimension_numbers = #tpu.dot_dimension_numbers<[1], [0], [0], [1], [0, 0, 1, 1], [], []>} : vector<32x256xf32>, vector<256x128xf32>, vector<32x128xf32> -> vector<32x128xf32>
    %20 = arith.addf %17, %19 : vector<32x128xf32>
    %c0_15 = arith.constant 0 : index
    %c0_16 = arith.constant 0 : index
    %21 = vector.load %arg7[%c0_15, %c0_16] : memref<32x128xf32, #tpu.memory_space<vmem>>, vector<32x128xf32>
    tpu.vector_store %arg7[%c0_15, %c0_16], %20 {strides = array<i32>} : memref<32x128xf32, #tpu.memory_space<vmem>>, vector<32x128xf32>,
    %c0_i32_17 = arith.constant 0 : i32
    %22 = arith.cmpi eq, %arg1, %c0_i32_17 : i32
    %23 = arith.extui %22 : i1 to i32
    %c0_i32_18 = arith.constant 0 : i32
    %24 = arith.cmpi ne, %23, %c0_i32_18 : i32
    scf.if %24 {
      %c0_19 = arith.constant 0 : index
      %c0_20 = arith.constant 0 : index
      %25 = vector.load %arg7[%c0_19, %c0_20] : memref<32x128xf32, #tpu.memory_space<vmem>>, vector<32x128xf32>
      %c0_21 = arith.constant 0 : index
      %c0_22 = arith.constant 0 : index
      %26 = vector.load %arg6[%c0_21, %c0_22] : memref<32x128xf32, #tpu.memory_space<vmem>>, vector<32x128xf32>
      tpu.vector_store %arg6[%c0_21, %c0_22], %25 {strides = array<i32>} : memref<32x128xf32, #tpu.memory_space<vmem>>, vector<32x128xf32>,
    } else {
    }
    return
  }
  func.func @transform_0(%arg0: i32, %arg1: i32) -> (i32, i32) {
    %c0_i32 = arith.constant 0 : i32
    %c0_i32_0 = arith.constant 0 : i32
    return %arg0, %c0_i32 : i32, i32
  }
  func.func @transform_1(%arg0: i32, %arg1: i32) -> (i32, i32) {
    %c0_i32 = arith.constant 0 : i32
    %c0_i32_0 = arith.constant 0 : i32
    return %c0_i32, %arg1 : i32, i32
  }
  func.func @transform_2(%arg0: i32, %arg1: i32) -> (i32, i32) {
    %c0_i32 = arith.constant 0 : i32
    %c0_i32_0 = arith.constant 0 : i32
    return %c0_i32, %arg1 : i32, i32
  }
  func.func @transform_3(%arg0: i32, %arg1: i32) -> (i32, i32) {
    %c0_i32 = arith.constant 0 : i32
    %c0_i32_0 = arith.constant 0 : i32
    return %arg1, %c0_i32 : i32, i32
  }
  func.func @transform_4(%arg0: i32, %arg1: i32) -> (i32, i32) {
    %c0_i32 = arith.constant 0 : i32
    %c0_i32_0 = arith.constant 0 : i32
    return %arg0, %c0_i32 : i32, i32
  }
}

</mosaic_0001>

<llo_original>
// kernel: qwen2_mlp.1
$region0: #{qwen2_mlp.1}
  #allocation0 [shape = 'u32[]', space=smem, size = 0x4, offset = 0x4, fixed_abs, tag = 'smem constant byte address 0x4 - core index']
  #allocation1 [shape = 'u32[144,128]{1,0:T(1,128)}', space=vmem, size = 0x12000, scoped, tag = 'internal scratch']
  #allocation2 [shape = 'f32[32,128]{1,0:T(8,128)}', space=vmem, size = 0x4000, scoped, tag = 'scratch operand']
  %s0 = inlined_call_operand.hbm [shape: f32[32,128], index: 0, kind: input, shape index: {}]
  %s1 = inlined_call_operand.hbm [shape: f32[128,256], index: 1, kind: input, shape index: {}]
  %s2 = inlined_call_operand.hbm [shape: f32[128,256], index: 2, kind: input, shape index: {}]
  %s3 = inlined_call_operand.hbm [shape: f32[256,128], index: 3, kind: input, shape index: {}]
  %s4 = inlined_call_operand.hbm [shape: f32[32,128], index: 4, kind: output, shape index: {}]
  %s5 = sld [smem:[#allocation0]]
  $region50: #{qwen2_mlp.1} parent=0
    _
  %s7 = ssub.s32 1, %s5
  %s8 = scalar_select 0, %s7, %s5
  $region1: #{qwen2_mlp.1} parent=0
    #allocation3 [shape = 'u8[16384]{0}', space=vmem, size = 0x4000, scoped, tag = 'input window, operand 0, single buffered']
    #allocation4 [shape = 's32[1]{0}', space=sflag, size = 0x4, scoped, tag = 'scoped memory for qwen2_mlp.1']
    #allocation5 [shape = 's32[1]{0}', space=sflag, size = 0x4, scoped, tag = 'scoped memory for qwen2_mlp.1']
    #allocation6 [shape = 'u8[131072]{0}', space=vmem, size = 0x20000, scoped, tag = 'input window, operand 1, single buffered']
    #allocation7 [shape = 's32[1]{0}', space=sflag, size = 0x4, scoped, tag = 'scoped memory for qwen2_mlp.1']
    #allocation8 [shape = 'u8[131072]{0}', space=vmem, size = 0x20000, scoped, tag = 'input window, operand 2, single buffered']
    #allocation9 [shape = 'u8[131072]{0}', space=vmem, size = 0x20000, scoped, tag = 'input window, operand 3, single buffered']
    #allocation10 [shape = 's32[1]{0}', space=sflag, size = 0x4, scoped, tag = 'scoped memory for qwen2_mlp.1']
    #allocation11 [shape = 'u8[16384]{0}', space=vmem, size = 0x4000, scoped, tag = 'output window, operand 0, single buffered']
    %9 = vsyncpa [#allocation4], 0
    %10 = vsyncpa [#allocation7], 0
    %11 = vsyncpa [#allocation10], 0
    %12 = vsyncpa [#allocation5], 0
    // Predicated region
    $region2: #{qwen2_mlp.1} parent=1 // pred_check
      _
    $region3: #{qwen2_mlp.1} parent=1 // pred_check_branch
      %14 = sbr.rel (0) target = $region5
    $region4: #{qwen2_mlp.1} parent=1 // pred_region
      %s16 = ssub.s32 512, 512
      %17 = vsyncadd [#allocation4], %s16
      %s18 = sshll.u32 [#allocation3], 4
      %s19 = int_to_ptr.vmem [resolvable:$true] %s18
      %24 = dma.hbm_to_vmem [thread:$0]  %s0, 512, %s19, [#allocation4], 128, 128, 8
    $region5: #{qwen2_mlp.1} parent=1 // pred_fallthru
      _
    // Predicated region
    $region6: #{qwen2_mlp.1} parent=1 // pred_check
      _
    $region7: #{qwen2_mlp.1} parent=1 // pred_check_branch
      %26 = sbr.rel (0) target = $region9
    $region8: #{qwen2_mlp.1} parent=1 // pred_region
      %s28 = ssub.s32 4096, 4096
      %29 = vsyncadd [#allocation7], %s28
      %s30 = sshll.u32 [#allocation6], 4
      %s31 = int_to_ptr.vmem [resolvable:$true] %s30
      %36 = dma.hbm_to_vmem [thread:$0]  %s1, 4096, %s31, [#allocation7], 256, 256, 16
    $region9: #{qwen2_mlp.1} parent=1 // pred_fallthru
      _
    // Predicated region
    $region10: #{qwen2_mlp.1} parent=1 // pred_check
      _
    $region11: #{qwen2_mlp.1} parent=1 // pred_check_branch
      %38 = sbr.rel (0) target = $region13
    $region12: #{qwen2_mlp.1} parent=1 // pred_region
      %s40 = ssub.s32 4096, 4096
      %41 = vsyncadd [#allocation7], %s40
      %s42 = sshll.u32 [#allocation8], 4
      %s43 = int_to_ptr.vmem [resolvable:$true] %s42
      %48 = dma.hbm_to_vmem [thread:$0]  %s2, 4096, %s43, [#allocation7], 256, 256, 16
    $region13: #{qwen2_mlp.1} parent=1 // pred_fallthru
      _
    // Predicated region
    $region14: #{qwen2_mlp.1} parent=1 // pred_check
      _
    $region15: #{qwen2_mlp.1} parent=1 // pred_check_branch
      %50 = sbr.rel (0) target = $region17
    $region16: #{qwen2_mlp.1} parent=1 // pred_region
      %s52 = ssub.s32 4096, 4096
      %53 = vsyncadd [#allocation10], %s52
      %s54 = sshll.u32 [#allocation9], 4
      %s55 = int_to_ptr.vmem [resolvable:$true] %s54
      %60 = dma.hbm_to_vmem [thread:$0]  %s3, 4096, %s55, [#allocation10], 128, 128, 8
    $region17: #{qwen2_mlp.1} parent=1 // pred_fallthru
      _
    // Predicated region
    $region18: #{qwen2_mlp.1} parent=1 // pred_check
      _
    $region19: #{qwen2_mlp.1} parent=1 // pred_check_branch
      %62 = sbr.rel (0) target = $region21
    $region20: #{qwen2_mlp.1} parent=1 // pred_region
      %63 = dma.done [#allocation4], 512
    $region21: #{qwen2_mlp.1} parent=1 // pred_fallthru
      _
    // Predicated region
    $region22: #{qwen2_mlp.1} parent=1 // pred_check
      _
    $region23: #{qwen2_mlp.1} parent=1 // pred_check_branch
      %65 = sbr.rel (0) target = $region25
    $region24: #{qwen2_mlp.1} parent=1 // pred_region
      %66 = dma.done [#allocation7], 4096
    $region25: #{qwen2_mlp.1} parent=1 // pred_fallthru
      _
    // Predicated region
    $region26: #{qwen2_mlp.1} parent=1 // pred_check
      _
    $region27: #{qwen2_mlp.1} parent=1 // pred_check_branch
      %68 = sbr.rel (0) target = $region29
    $region28: #{qwen2_mlp.1} parent=1 // pred_region
      %69 = dma.done [#allocation7], 4096
    $region29: #{qwen2_mlp.1} parent=1 // pred_fallthru
      _
    // Predicated region
    $region30: #{qwen2_mlp.1} parent=1 // pred_check
      _
    $region31: #{qwen2_mlp.1} parent=1 // pred_check_branch
      %71 = sbr.rel (0) target = $region33
    $region32: #{qwen2_mlp.1} parent=1 // pred_region
      %72 = dma.done [#allocation10], 4096
    $region33: #{qwen2_mlp.1} parent=1 // pred_fallthru
      _
    %p73 = scmp.eq.s32.totalorder 0, 0
    // Predicated region
    $region34: #{qwen2_mlp.1} parent=1 // pred_check
      %p74 = pneg %p73
    $region35: #{qwen2_mlp.1} parent=1 // pred_check_branch
      %76 = sbr.rel (%p74) target = $region37
    $region36: #{qwen2_mlp.1} parent=1 // pred_region
      %77 = vst [vmem:[#allocation2] sm:$0xff] 0.0
      %78 = vst [vmem:[#allocation2 + $0x8] sm:$0xff] 0.0
      %79 = vst [vmem:[#allocation2 + $0x10] sm:$0xff] 0.0
      %80 = vst [vmem:[#allocation2 + $0x18] sm:$0xff] 0.0
    $region37: #{qwen2_mlp.1} parent=1 // pred_fallthru
      _
    %v81 = vld [vmem:[#allocation3] sm:$0xff]
    %v82 = vld [vmem:[#allocation3 + $0x8] sm:$0xff]
    %v83 = vld [vmem:[#allocation3 + $0x10] sm:$0xff]
    %v84 = vld [vmem:[#allocation3 + $0x18] sm:$0xff]
    %v85 = vld [vmem:[#allocation6] sm:$0xff]
    %v86 = vld [vmem:[#allocation6 + $0x8] sm:$0xff]
    %v87 = vld [vmem:[#allocation6 + $0x10] sm:$0xff]
    %v88 = vld [vmem:[#allocation6 + $0x18] sm:$0xff]
    %v89 = vld [vmem:[#allocation6 + $0x20] sm:$0xff]
    %v90 = vld [vmem:[#allocation6 + $0x28] sm:$0xff]
    %v91 = vld [vmem:[#allocation6 + $0x30] sm:$0xff]
    %v92 = vld [vmem:[#allocation6 + $0x38] sm:$0xff]
    %v93 = vld [vmem:[#allocation6 + $0x40] sm:$0xff]
    %v94 = vld [vmem:[#allocation6 + $0x48] sm:$0xff]
    %v95 = vld [vmem:[#allocation6 + $0x50] sm:$0xff]
    %v96 = vld [vmem:[#allocation6 + $0x58] sm:$0xff]
    %v97 = vld [vmem:[#allocation6 + $0x60] sm:$0xff]
    %v98 = vld [vmem:[#allocation6 + $0x68] sm:$0xff]
    %v99 = vld [vmem:[#allocation6 + $0x70] sm:$0xff]
    %v100 = vld [vmem:[#allocation6 + $0x78] sm:$0xff]
    %v101 = vld [vmem:[#allocation6 + $0x80] sm:$0xff]
    %v102 = vld [vmem:[#allocation6 + $0x88] sm:$0xff]
    %v103 = vld [vmem:[#allocation6 + $0x90] sm:$0xff]
    %v104 = vld [vmem:[#allocation6 + $0x98] sm:$0xff]
    %v105 = vld [vmem:[#allocation6 + $0xa0] sm:$0xff]
    %v106 = vld [vmem:[#allocation6 + $0xa8] sm:$0xff]
    %v107 = vld [vmem:[#allocation6 + $0xb0] sm:$0xff]
    %v108 = vld [vmem:[#allocation6 + $0xb8] sm:$0xff]
    %v109 = vld [vmem:[#allocation6 + $0xc0] sm:$0xff]
    %v110 = vld [vmem:[#allocation6 + $0xc8] sm:$0xff]
    %v111 = vld [vmem:[#allocation6 + $0xd0] sm:$0xff]
    %v112 = vld [vmem:[#allocation6 + $0xd8] sm:$0xff]
    %v113 = vld [vmem:[#allocation6 + $0xe0] sm:$0xff]
    %v114 = vld [vmem:[#allocation6 + $0xe8] sm:$0xff]
    %v115 = vld [vmem:[#allocation6 + $0xf0] sm:$0xff]
    %v116 = vld [vmem:[#allocation6 + $0xf8] sm:$0xff]
    %117 = vmatprep.subr.mxu0 %v86
    %118 = vmatpush1.msra.mxu0 %v85
    %119 = vmatprep.subr.mxu0 %v88
    %120 = vmatpush1.msra.mxu0 %v87
    %121 = vmatprep.subr.mxu0 %v90
    %122 = vmatpush1.msra.mxu0 %v89
    %123 = vmatprep.subr.mxu0 %v92
    %124 = vmatpush1.msra.mxu0 %v91
    %125 = vmatprep.subr.mxu0 %v94
    %126 = vmatpush1.msra.mxu0 %v93
    %127 = vmatprep.subr.mxu0 %v96
    %128 = vmatpush1.msra.mxu0 %v95
    %129 = vmatprep.subr.mxu0 %v98
    %130 = vmatpush1.msra.mxu0 %v97
    %131 = vmatprep.subr.mxu0 %v100
    %132 = vmatpush1.msra.mxu0 %v99
    %133 = vmatprep.subr.mxu0 %v102
    %134 = vmatpush1.msra.mxu0 %v101
    %135 = vmatprep.subr.mxu0 %v104
    %136 = vmatpush1.msra.mxu0 %v103
    %137 = vmatprep.subr.mxu0 %v106
    %138 = vmatpush1.msra.mxu0 %v105
    %139 = vmatprep.subr.mxu0 %v108
    %140 = vmatpush1.msra.mxu0 %v107
    %141 = vmatprep.subr.mxu0 %v110
    %142 = vmatpush1.msra.mxu0 %v109
    %143 = vmatprep.subr.mxu0 %v112
    %144 = vmatpush1.msra.mxu0 %v111
    %145 = vmatprep.subr.mxu0 %v114
    %146 = vmatpush1.msra.mxu0 %v113
    %147 = vmatprep.subr.mxu0 %v116
    %148 = vmatpush1.msra.mxu0 %v115
    %149 = vmatprep.subr.mxu0 0.0
    %150 = vmatpush1.msra.mxu0 0.0
    %151 = vmatprep.subr.mxu0 0.0
    %152 = vmatpush1.msra.mxu0 0.0
    %153 = vmatprep.subr.mxu0 0.0
    %154 = vmatpush1.msra.mxu0 0.0
    %155 = vmatprep.subr.mxu0 0.0
    %156 = vmatpush1.msra.mxu0 0.0
    %157 = vmatprep.subr.mxu0 0.0
    %158 = vmatpush1.msra.mxu0 0.0
    %159 = vmatprep.subr.mxu0 0.0
    %160 = vmatpush1.msra.mxu0 0.0
    %161 = vmatprep.subr.mxu0 0.0
    %162 = vmatpush1.msra.mxu0 0.0
    %163 = vmatprep.subr.mxu0 0.0
    %164 = vmatpush1.msra.mxu0 0.0
    %165 = vmatprep.subr.mxu0 0.0
    %166 = vmatpush1.msra.mxu0 0.0
    %167 = vmatprep.subr.mxu0 0.0
    %168 = vmatpush1.msra.mxu0 0.0
    %169 = vmatprep.subr.mxu0 0.0
    %170 = vmatpush1.msra.mxu0 0.0
    %171 = vmatprep.subr.mxu0 0.0
    %172 = vmatpush1.msra.mxu0 0.0
    %173 = vmatprep.subr.mxu0 0.0
    %174 = vmatpush1.msra.mxu0 0.0
    %175 = vmatprep.subr.mxu0 0.0
    %176 = vmatpush1.msra.mxu0 0.0
    %177 = vmatprep.subr.mxu0 0.0
    %178 = vmatpush1.msra.mxu0 0.0
    %179 = vmatprep.subr.mxu0 0.0
    %180 = vmatpush1.msra.mxu0 0.0
    %181 = vmatprep.mubr.f32.mxu0 0.0
    %182 = vmatmul.mubr.f32.gmra.mrb[0].mxu0 %v81
    %v183 = vpop.f32.mrb[0].mxu0
    %v184 = vadd.f32 0.0, %v183
    %v185 = vpop.f32.mrb[0].mxu0
    %v186 = vadd.f32 0.0, %v185
    %187 = vmatprep.mubr.f32.mxu0 0.0
    %188 = vmatmul.mubr.f32.gmra.mrb[0].mxu0 %v82
    %v189 = vpop.f32.mrb[0].mxu0
    %v190 = vadd.f32 0.0, %v189
    %v191 = vpop.f32.mrb[0].mxu0
    %v192 = vadd.f32 0.0, %v191
    %193 = vmatprep.mubr.f32.mxu0 0.0
    %194 = vmatmul.mubr.f32.gmra.mrb[0].mxu0 %v83
    %v195 = vpop.f32.mrb[0].mxu0
    %v196 = vadd.f32 0.0, %v195
    %v197 = vpop.f32.mrb[0].mxu0
    %v198 = vadd.f32 0.0, %v197
    %199 = vmatprep.mubr.f32.mxu0 0.0
    %200 = vmatmul.mubr.f32.gmra.mrb[0].mxu0 %v84
    %v201 = vpop.f32.mrb[0].mxu0
    %v202 = vadd.f32 0.0, %v201
    %v203 = vpop.f32.mrb[0].mxu0
    %v204 = vadd.f32 0.0, %v203
    %205 = vdwg.mxu0
    %v206 = vld [vmem:[#allocation8] sm:$0xff]
    %v207 = vld [vmem:[#allocation8 + $0x8] sm:$0xff]
    %v208 = vld [vmem:[#allocation8 + $0x10] sm:$0xff]
    %v209 = vld [vmem:[#allocation8 + $0x18] sm:$0xff]
    %v210 = vld [vmem:[#allocation8 + $0x20] sm:$0xff]
    %v211 = vld [vmem:[#allocation8 + $0x28] sm:$0xff]
    %v212 = vld [vmem:[#allocation8 + $0x30] sm:$0xff]
    %v213 = vld [vmem:[#allocation8 + $0x38] sm:$0xff]
    %v214 = vld [vmem:[#allocation8 + $0x40] sm:$0xff]
    %v215 = vld [vmem:[#allocation8 + $0x48] sm:$0xff]
    %v216 = vld [vmem:[#allocation8 + $0x50] sm:$0xff]
    %v217 = vld [vmem:[#allocation8 + $0x58] sm:$0xff]
    %v218 = vld [vmem:[#allocation8 + $0x60] sm:$0xff]
    %v219 = vld [vmem:[#allocation8 + $0x68] sm:$0xff]
    %v220 = vld [vmem:[#allocation8 + $0x70] sm:$0xff]
    %v221 = vld [vmem:[#allocation8 + $0x78] sm:$0xff]
    %v222 = vld [vmem:[#allocation8 + $0x80] sm:$0xff]
    %v223 = vld [vmem:[#allocation8 + $0x88] sm:$0xff]
    %v224 = vld [vmem:[#allocation8 + $0x90] sm:$0xff]
    %v225 = vld [vmem:[#allocation8 + $0x98] sm:$0xff]
    %v226 = vld [vmem:[#allocation8 + $0xa0] sm:$0xff]
    %v227 = vld [vmem:[#allocation8 + $0xa8] sm:$0xff]
    %v228 = vld [vmem:[#allocation8 + $0xb0] sm:$0xff]
    %v229 = vld [vmem:[#allocation8 + $0xb8] sm:$0xff]
    %v230 = vld [vmem:[#allocation8 + $0xc0] sm:$0xff]
    %v231 = vld [vmem:[#allocation8 + $0xc8] sm:$0xff]
    %v232 = vld [vmem:[#allocation8 + $0xd0] sm:$0xff]
    %v233 = vld [vmem:[#allocation8 + $0xd8] sm:$0xff]
    %v234 = vld [vmem:[#allocation8 + $0xe0] sm:$0xff]
    %v235 = vld [vmem:[#allocation8 + $0xe8] sm:$0xff]
    %v236 = vld [vmem:[#allocation8 + $0xf0] sm:$0xff]
    %v237 = vld [vmem:[#allocation8 + $0xf8] sm:$0xff]
    %238 = vmatprep.subr.mxu0 %v207
    %239 = vmatpush1.msra.mxu0 %v206
    %240 = vmatprep.subr.mxu0 %v209
    %241 = vmatpush1.msra.mxu0 %v208
    %242 = vmatprep.subr.mxu0 %v211
    %243 = vmatpush1.msra.mxu0 %v210
    %244 = vmatprep.subr.mxu0 %v213
    %245 = vmatpush1.msra.mxu0 %v212
    %246 = vmatprep.subr.mxu0 %v215
    %247 = vmatpush1.msra.mxu0 %v214
    %248 = vmatprep.subr.mxu0 %v217
    %249 = vmatpush1.msra.mxu0 %v216
    %250 = vmatprep.subr.mxu0 %v219
    %251 = vmatpush1.msra.mxu0 %v218
    %252 = vmatprep.subr.mxu0 %v221
    %253 = vmatpush1.msra.mxu0 %v220
    %254 = vmatprep.subr.mxu0 %v223
    %255 = vmatpush1.msra.mxu0 %v222
    %256 = vmatprep.subr.mxu0 %v225
    %257 = vmatpush1.msra.mxu0 %v224
    %258 = vmatprep.subr.mxu0 %v227
    %259 = vmatpush1.msra.mxu0 %v226
    %260 = vmatprep.subr.mxu0 %v229
    %261 = vmatpush1.msra.mxu0 %v228
    %262 = vmatprep.subr.mxu0 %v231
    %263 = vmatpush1.msra.mxu0 %v230
    %264 = vmatprep.subr.mxu0 %v233
    %265 = vmatpush1.msra.mxu0 %v232
    %266 = vmatprep.subr.mxu0 %v235
    %267 = vmatpush1.msra.mxu0 %v234
    %268 = vmatprep.subr.mxu0 %v237
    %269 = vmatpush1.msra.mxu0 %v236
    %270 = vmatprep.subr.mxu0 0.0
    %271 = vmatpush1.msra.mxu0 0.0
    %272 = vmatprep.subr.mxu0 0.0
    %273 = vmatpush1.msra.mxu0 0.0
    %274 = vmatprep.subr.mxu0 0.0
    %275 = vmatpush1.msra.mxu0 0.0
    %276 = vmatprep.subr.mxu0 0.0
    %277 = vmatpush1.msra.mxu0 0.0
    %278 = vmatprep.subr.mxu0 0.0
    %279 = vmatpush1.msra.mxu0 0.0
    %280 = vmatprep.subr.mxu0 0.0
    %281 = vmatpush1.msra.mxu0 0.0
    %282 = vmatprep.subr.mxu0 0.0
    %283 = vmatpush1.msra.mxu0 0.0
    %284 = vmatprep.subr.mxu0 0.0
    %285 = vmatpush1.msra.mxu0 0.0
    %286 = vmatprep.subr.mxu0 0.0
    %287 = vmatpush1.msra.mxu0 0.0
    %288 = vmatprep.subr.mxu0 0.0
    %289 = vmatpush1.msra.mxu0 0.0
    %290 = vmatprep.subr.mxu0 0.0
    %291 = vmatpush1.msra.mxu0 0.0
    %292 = vmatprep.subr.mxu0 0.0
    %293 = vmatpush1.msra.mxu0 0.0
    %294 = vmatprep.subr.mxu0 0.0
    %295 = vmatpush1.msra.mxu0 0.0
    %296 = vmatprep.subr.mxu0 0.0
    %297 = vmatpush1.msra.mxu0 0.0
    %298 = vmatprep.subr.mxu0 0.0
    %299 = vmatpush1.msra.mxu0 0.0
    %300 = vmatprep.subr.mxu0 0.0
    %301 = vmatpush1.msra.mxu0 0.0
    %302 = vmatprep.mubr.f32.mxu0 0.0
    %303 = vmatmul.mubr.f32.gmra.mrb[0].mxu0 %v81
    %v304 = vpop.f32.mrb[0].mxu0
    %v305 = vadd.f32 0.0, %v304
    %v306 = vpop.f32.mrb[0].mxu0
    %v307 = vadd.f32 0.0, %v306
    %308 = vmatprep.mubr.f32.mxu0 0.0
    %309 = vmatmul.mubr.f32.gmra.mrb[0].mxu0 %v82
    %v310 = vpop.f32.mrb[0].mxu0
    %v311 = vadd.f32 0.0, %v310
    %v312 = vpop.f32.mrb[0].mxu0
    %v313 = vadd.f32 0.0, %v312
    %314 = vmatprep.mubr.f32.mxu0 0.0
    %315 = vmatmul.mubr.f32.gmra.mrb[0].mxu0 %v83
    %v316 = vpop.f32.mrb[0].mxu0
    %v317 = vadd.f32 0.0, %v316
    %v318 = vpop.f32.mrb[0].mxu0
    %v319 = vadd.f32 0.0, %v318
    %320 = vmatprep.mubr.f32.mxu0 0.0
    %321 = vmatmul.mubr.f32.gmra.mrb[0].mxu0 %v84
    %v322 = vpop.f32.mrb[0].mxu0
    %v323 = vadd.f32 0.0, %v322
    %v324 = vpop.f32.mrb[0].mxu0
    %v325 = vadd.f32 0.0, %v324
    %326 = vdwg.mxu0
    %v327 = vsub.f32 0.0, %v184
    %v328 = vsub.f32 0.0, %v186
    %v329 = vsub.f32 0.0, %v190
    %v330 = vsub.f32 0.0, %v192
    %v331 = vsub.f32 0.0, %v196
    %v332 = vsub.f32 0.0, %v198
    %v333 = vsub.f32 0.0, %v202
    %v334 = vsub.f32 0.0, %v204
    %v335 = vmul.f32 %v327, 1.442695
    %v336 = vpow.pop %v335
    %v337 = vmul.f32 %v328, 1.442695
    %v338 = vpow.pop %v337
    %v339 = vmul.f32 %v329, 1.442695
    %v340 = vpow.pop %v339
    %v341 = vmul.f32 %v330, 1.442695
    %v342 = vpow.pop %v341
    %v343 = vmul.f32 %v331, 1.442695
    %v344 = vpow.pop %v343
    %v345 = vmul.f32 %v332, 1.442695
    %v346 = vpow.pop %v345
    %v347 = vmul.f32 %v333, 1.442695
    %v348 = vpow.pop %v347
    %v349 = vmul.f32 %v334, 1.442695
    %v350 = vpow.pop %v349
    %v351 = vadd.f32 %v336, 1.0
    %v352 = vadd.f32 %v338, 1.0
    %v353 = vadd.f32 %v340, 1.0
    %v354 = vadd.f32 %v342, 1.0
    %v355 = vadd.f32 %v344, 1.0
    %v356 = vadd.f32 %v346, 1.0
    %v357 = vadd.f32 %v348, 1.0
    %v358 = vadd.f32 %v350, 1.0
    %v359 = vrcp.pop %v351
    %v360 = vmul.f32 1.0, %v359
    %v361 = vrcp.pop %v352
    %v362 = vmul.f32 1.0, %v361
    %v363 = vrcp.pop %v353
    %v364 = vmul.f32 1.0, %v363
    %v365 = vrcp.pop %v354
    %v366 = vmul.f32 1.0, %v365
    %v367 = vrcp.pop %v355
    %v368 = vmul.f32 1.0, %v367
    %v369 = vrcp.pop %v356
    %v370 = vmul.f32 1.0, %v369
    %v371 = vrcp.pop %v357
    %v372 = vmul.f32 1.0, %v371
    %v373 = vrcp.pop %v358
    %v374 = vmul.f32 1.0, %v373
    %v375 = vmul.f32 %v184, %v360
    %v376 = vmul.f32 %v186, %v362
    %v377 = vmul.f32 %v190, %v364
    %v378 = vmul.f32 %v192, %v366
    %v379 = vmul.f32 %v196, %v368
    %v380 = vmul.f32 %v198, %v370
    %v381 = vmul.f32 %v202, %v372
    %v382 = vmul.f32 %v204, %v374
    %v383 = vmul.f32 %v375, %v305
    %v384 = vmul.f32 %v376, %v307
    %v385 = vmul.f32 %v377, %v311
    %v386 = vmul.f32 %v378, %v313
    %v387 = vmul.f32 %v379, %v317
    %v388 = vmul.f32 %v380, %v319
    %v389 = vmul.f32 %v381, %v323
    %v390 = vmul.f32 %v382, %v325
    %v391 = vld [vmem:[#allocation2] sm:$0xff]
    %v392 = vld [vmem:[#allocation2 + $0x8] sm:$0xff]
    %v393 = vld [vmem:[#allocation2 + $0x10] sm:$0xff]
    %v394 = vld [vmem:[#allocation2 + $0x18] sm:$0xff]
    %v395 = vld [vmem:[#allocation9] sm:$0xff]
    %v396 = vld [vmem:[#allocation9 + $0x8] sm:$0xff]
    %v397 = vld [vmem:[#allocation9 + $0x10] sm:$0xff]
    %v398 = vld [vmem:[#allocation9 + $0x18] sm:$0xff]
    %v399 = vld [vmem:[#allocation9 + $0x20] sm:$0xff]
    %v400 = vld [vmem:[#allocation9 + $0x28] sm:$0xff]
    %v401 = vld [vmem:[#allocation9 + $0x30] sm:$0xff]
    %v402 = vld [vmem:[#allocation9 + $0x38] sm:$0xff]
    %v403 = vld [vmem:[#allocation9 + $0x40] sm:$0xff]
    %v404 = vld [vmem:[#allocation9 + $0x48] sm:$0xff]
    %v405 = vld [vmem:[#allocation9 + $0x50] sm:$0xff]
    %v406 = vld [vmem:[#allocation9 + $0x58] sm:$0xff]
    %v407 = vld [vmem:[#allocation9 + $0x60] sm:$0xff]
    %v408 = vld [vmem:[#allocation9 + $0x68] sm:$0xff]
    %v409 = vld [vmem:[#allocation9 + $0x70] sm:$0xff]
    %v410 = vld [vmem:[#allocation9 + $0x78] sm:$0xff]
    %v411 = vld [vmem:[#allocation9 + $0x80] sm:$0xff]
    %v412 = vld [vmem:[#allocation9 + $0x88] sm:$0xff]
    %v413 = vld [vmem:[#allocation9 + $0x90] sm:$0xff]
    %v414 = vld [vmem:[#allocation9 + $0x98] sm:$0xff]
    %v415 = vld [vmem:[#allocation9 + $0xa0] sm:$0xff]
    %v416 = vld [vmem:[#allocation9 + $0xa8] sm:$0xff]
    %v417 = vld [vmem:[#allocation9 + $0xb0] sm:$0xff]
    %v418 = vld [vmem:[#allocation9 + $0xb8] sm:$0xff]
    %v419 = vld [vmem:[#allocation9 + $0xc0] sm:$0xff]
    %v420 = vld [vmem:[#allocation9 + $0xc8] sm:$0xff]
    %v421 = vld [vmem:[#allocation9 + $0xd0] sm:$0xff]
    %v422 = vld [vmem:[#allocation9 + $0xd8] sm:$0xff]
    %v423 = vld [vmem:[#allocation9 + $0xe0] sm:$0xff]
    %v424 = vld [vmem:[#allocation9 + $0xe8] sm:$0xff]
    %v425 = vld [vmem:[#allocation9 + $0xf0] sm:$0xff]
    %v426 = vld [vmem:[#allocation9 + $0xf8] sm:$0xff]
    %427 = vmatprep.subr.mxu0 0.0
    %428 = vmatpush1.msra.mxu0 %v395
    %429 = vmatprep.subr.mxu0 0.0
    %430 = vmatpush1.msra.mxu0 %v396
    %431 = vmatprep.subr.mxu0 0.0
    %432 = vmatpush1.msra.mxu0 %v397
    %433 = vmatprep.subr.mxu0 0.0
    %434 = vmatpush1.msra.mxu0 %v398
    %435 = vmatprep.subr.mxu0 0.0
    %436 = vmatpush1.msra.mxu0 %v399
    %437 = vmatprep.subr.mxu0 0.0
    %438 = vmatpush1.msra.mxu0 %v400
    %439 = vmatprep.subr.mxu0 0.0
    %440 = vmatpush1.msra.mxu0 %v401
    %441 = vmatprep.subr.mxu0 0.0
    %442 = vmatpush1.msra.mxu0 %v402
    %443 = vmatprep.subr.mxu0 0.0
    %444 = vmatpush1.msra.mxu0 %v403
    %445 = vmatprep.subr.mxu0 0.0
    %446 = vmatpush1.msra.mxu0 %v404
    %447 = vmatprep.subr.mxu0 0.0
    %448 = vmatpush1.msra.mxu0 %v405
    %449 = vmatprep.subr.mxu0 0.0
    %450 = vmatpush1.msra.mxu0 %v406
    %451 = vmatprep.subr.mxu0 0.0
    %452 = vmatpush1.msra.mxu0 %v407
    %453 = vmatprep.subr.mxu0 0.0
    %454 = vmatpush1.msra.mxu0 %v408
    %455 = vmatprep.subr.mxu0 0.0
    %456 = vmatpush1.msra.mxu0 %v409
    %457 = vmatprep.subr.mxu0 0.0
    %458 = vmatpush1.msra.mxu0 %v410
    %459 = vmatprep.subr.mxu0 0.0
    %460 = vmatpush1.msra.mxu0 %v411
    %461 = vmatprep.subr.mxu0 0.0
    %462 = vmatpush1.msra.mxu0 %v412
    %463 = vmatprep.subr.mxu0 0.0
    %464 = vmatpush1.msra.mxu0 %v413
    %465 = vmatprep.subr.mxu0 0.0
    %466 = vmatpush1.msra.mxu0 %v414
    %467 = vmatprep.subr.mxu0 0.0
    %468 = vmatpush1.msra.mxu0 %v415
    %469 = vmatprep.subr.mxu0 0.0
    %470 = vmatpush1.msra.mxu0 %v416
    %471 = vmatprep.subr.mxu0 0.0
    %472 = vmatpush1.msra.mxu0 %v417
    %473 = vmatprep.subr.mxu0 0.0
    %474 = vmatpush1.msra.mxu0 %v418
    %475 = vmatprep.subr.mxu0 0.0
    %476 = vmatpush1.msra.mxu0 %v419
    %477 = vmatprep.subr.mxu0 0.0
    %478 = vmatpush1.msra.mxu0 %v420
    %479 = vmatprep.subr.mxu0 0.0
    %480 = vmatpush1.msra.mxu0 %v421
    %481 = vmatprep.subr.mxu0 0.0
    %482 = vmatpush1.msra.mxu0 %v422
    %483 = vmatprep.subr.mxu0 0.0
    %484 = vmatpush1.msra.mxu0 %v423
    %485 = vmatprep.subr.mxu0 0.0
    %486 = vmatpush1.msra.mxu0 %v424
    %487 = vmatprep.subr.mxu0 0.0
    %488 = vmatpush1.msra.mxu0 %v425
    %489 = vmatprep.subr.mxu0 0.0
    %490 = vmatpush1.msra.mxu0 %v426
    %491 = vmatprep.mubr.f32.mxu0 %v384
    %492 = vmatmul.mubr.f32.gmra.mrb[0].mxu0 %v383
    %v493 = vpop.f32.mrb[0].mxu0
    %v494 = vadd.f32 0.0, %v493
    %v495 = vpop.f32.mrb[0].mxu0
    %496 = vmatprep.mubr.f32.mxu0 %v386
    %497 = vmatmul.mubr.f32.gmra.mrb[0].mxu0 %v385
    %v498 = vpop.f32.mrb[0].mxu0
    %v499 = vadd.f32 0.0, %v498
    %v500 = vpop.f32.mrb[0].mxu0
    %501 = vmatprep.mubr.f32.mxu0 %v388
    %502 = vmatmul.mubr.f32.gmra.mrb[0].mxu0 %v387
    %v503 = vpop.f32.mrb[0].mxu0
    %v504 = vadd.f32 0.0, %v503
    %v505 = vpop.f32.mrb[0].mxu0
    %506 = vmatprep.mubr.f32.mxu0 %v390
    %507 = vmatmul.mubr.f32.gmra.mrb[0].mxu0 %v389
    %v508 = vpop.f32.mrb[0].mxu0
    %v509 = vadd.f32 0.0, %v508
    %v510 = vpop.f32.mrb[0].mxu0
    %511 = vdwg.mxu0
    %v512 = vadd.f32 %v391, %v494
    %v513 = vadd.f32 %v392, %v499
    %v514 = vadd.f32 %v393, %v504
    %v515 = vadd.f32 %v394, %v509
    %516 = vst [vmem:[#allocation2] sm:$0xff] %v512
    %517 = vst [vmem:[#allocation2 + $0x8] sm:$0xff] %v513
    %518 = vst [vmem:[#allocation2 + $0x10] sm:$0xff] %v514
    %519 = vst [vmem:[#allocation2 + $0x18] sm:$0xff] %v515
    // Predicated region
    $region38: #{qwen2_mlp.1} parent=1 // pred_check
      %p520 = pneg %p73
    $region39: #{qwen2_mlp.1} parent=1 // pred_check_branch
      %522 = sbr.rel (%p520) target = $region41
    $region40: #{qwen2_mlp.1} parent=1 // pred_region
      %v523 = vld [vmem:[#allocation2] sm:$0xff]
      %v524 = vld [vmem:[#allocation2 + $0x8] sm:$0xff]
      %v525 = vld [vmem:[#allocation2 + $0x10] sm:$0xff]
      %v526 = vld [vmem:[#allocation2 + $0x18] sm:$0xff]
      %527 = vst [vmem:[#allocation11] sm:$0xff] %v523
      %528 = vst [vmem:[#allocation11 + $0x8] sm:$0xff] %v524
      %529 = vst [vmem:[#allocation11 + $0x10] sm:$0xff] %v525
      %530 = vst [vmem:[#allocation11 + $0x18] sm:$0xff] %v526
    $region41: #{qwen2_mlp.1} parent=1 // pred_fallthru
      _
    // Predicated region
    $region42: #{qwen2_mlp.1} parent=1 // pred_check
      _
    $region43: #{qwen2_mlp.1} parent=1 // pred_check_branch
      %532 = sbr.rel (0) target = $region45
    $region44: #{qwen2_mlp.1} parent=1 // pred_region
      %s534 = ssub.s32 512, 512
      %535 = vsyncadd [#allocation5], %s534
      %s536 = sshll.u32 [#allocation11], 4
      %s537 = int_to_ptr.vmem [resolvable:$true] %s536
      %542 = dma.vmem_to_hbm [thread:$0]  %s537, 512, %s4, [#allocation5], 128, 128, 8
    $region45: #{qwen2_mlp.1} parent=1 // pred_fallthru
      _
    // Predicated region
    $region46: #{qwen2_mlp.1} parent=1 // pred_check
      _
    $region47: #{qwen2_mlp.1} parent=1 // pred_check_branch
      %544 = sbr.rel (0) target = $region49
    $region48: #{qwen2_mlp.1} parent=1 // pred_region
      %545 = dma.done [#allocation5], 512
    $region49: #{qwen2_mlp.1} parent=1 // pred_fallthru
      _
    %546 = vsyncpa [#allocation4], 1
    %547 = vsyncpa [#allocation7], 1
    %548 = vsyncpa [#allocation10], 1
    %549 = vsyncpa [#allocation5], 1

</llo_original>
